<compile_context>
chip_gen: v7x
topology: tpu7x:2x2x1
jax: 0.10.0
libtpu: 0.0.40
codegen_flags: <defaults>
</compile_context>

<pallas_src>
import math

import jax
import jax.numpy as jnp
from jax.experimental import pallas as pl
from jax.experimental.pallas import tpu as pltpu


# ----------------------------- kernels ---------------------------------------


def _proj_kernel(x_ref, w_ref, b_ref, o_ref):
    # x:(tm, d_model)  w:(d_model, tn)  b:(1, tn)  o:(tm, tn)
    acc = jnp.dot(x_ref[...], w_ref[...], preferred_element_type=jnp.float32)
    o_ref[...] = (acc + b_ref[...].astype(jnp.float32)).astype(o_ref.dtype)


def _proj_kernel_ktiled(x_ref, w_ref, b_ref, o_ref, acc_ref):
    # x:(tm, tk)  w:(tk, tn)  b:(1, tn)  o:(tm, tn)  acc:(tm, tn) f32 scratch
    k = pl.program_id(2)

    @pl.when(k == 0)
    def _():
        acc_ref[...] = jnp.zeros_like(acc_ref)

    acc_ref[...] += jnp.dot(x_ref[...], w_ref[...],
                            preferred_element_type=jnp.float32)

    @pl.when(k == pl.num_programs(2) - 1)
    def _():
        o_ref[...] = (acc_ref[...] + b_ref[...].astype(jnp.float32)).astype(o_ref.dtype)


# ------------------------- schedule selection ---------------------------------


def _vmem_capacity_bytes():
    """Generation-aware VMEM size; conservative (v7x per-TC) fallback."""
    try:
        cap = int(pltpu.get_tpu_info().vmem_capacity_bytes)
        if cap >= 16 * 1024 * 1024:
            return cap
    except Exception:
        pass
    return 64 * 1024 * 1024


def _unique(seq):
    seen, out = set(), []
    for s in seq:
        if s not in seen:
            seen.add(s)
            out.append(s)
    return out


def _choose_schedule(m, d_model, out_features, itemsize, budget_bytes):
    """Pick (tm, tn, tk) minimizing modeled HBM traffic under the VMEM budget.

    Grid order is (M, N, K) with K innermost.  Pallas skips re-fetching a block whose
    index is unchanged between consecutive grid steps, so:
        X traffic = |X| * (grid_n if grid_k > 1 else 1)
        W traffic = |W| * (1 if grid_n == grid_k == 1 else grid_m)
    """
    tm_cands = _unique([m] + [t for t in (1024, 512, 256, 128, 64, 32, 16, 8) if t < m])
    tn_cands = _unique([out_features]
                       + [t for t in (4096, 2048, 1024, 512, 256, 128)
                          if t < out_features])
    # K tiles must divide d_model exactly (a partial K block would feed padding
    # garbage into the accumulation).
    tk_cands = _unique([d_model] + [t for t in (2048, 1024, 512, 256, 128)
                                    if t < d_model and d_model % t == 0])

    def vmem_bytes(tm, tn, tk):
        b = 2 * (tm * tk + tk * tn + tn + tm * tn) * itemsize  # double-buffered blocks
        if tk < d_model:
            b += tm * tn * 4                                   # f32 accumulator scratch
        return b

    def traffic_and_steps(tm, tn, tk):
        gm = pl.cdiv(m, tm)
        gn = pl.cdiv(out_features, tn)
        gk = pl.cdiv(d_model, tk)
        x_reads = gn if gk > 1 else 1
        w_reads = 1 if (gn == 1 and gk == 1) else gm
        traffic = itemsize * (m * d_model * x_reads
                              + d_model * out_features * w_reads
                              + out_features
                              + m * out_features)
        return traffic, gm * gn * gk

    best_key, best_cfg = None, None
    fb_key, fb_cfg = None, None
    for tk in tk_cands:
        for tn in tn_cands:
            for tm in tm_cands:
                fp = vmem_bytes(tm, tn, tk)
                if fb_key is None or fp < fb_key:
                    fb_key, fb_cfg = fp, (tm, tn, tk)
                if fp > budget_bytes:
                    continue
                traffic, steps = traffic_and_steps(tm, tn, tk)
                key = (traffic, steps, -tm, -tn)
                if best_key is None or key < best_key:
                    best_key, best_cfg = key, (tm, tn, tk)
    # Robustness: if nothing fits the budget, take the smallest-footprint config and
    # let the compiler's scoped-VMEM limit arbitrate.
    return best_cfg if best_cfg is not None else fb_cfg


# ------------------------------- wrapper ---------------------------------------


def prepare_for_mha(x, weight_t, bias, heads, d_k, *,
                    compute_dtype=None, schedule_override=None):
    """Linear projection + split into heads (PrepareForMultiHeadAttention.forward).

    x        : [..., d_model]              (e.g. [seq, batch, d_model])
    weight_t : [d_model, heads*d_k]        (nn.Linear weight, transposed ONCE at init)
    bias     : [heads*d_k]
    returns  : [..., heads, d_k]
    """
    *head_shape, d_model = x.shape
    out_features = heads * d_k
    assert weight_t.shape == (d_model, out_features)
    assert bias.shape == (out_features,)

    if compute_dtype is not None:            # optional bf16 path for bf16 models
        x = x.astype(compute_dtype)
        weight_t = weight_t.astype(compute_dtype)
        # bias stays in its original dtype; the bias add is done in f32 in-kernel.

    m = 1
    for s in head_shape:
        m *= s

    x2d = x.reshape(m, d_model)
    b2d = bias.reshape(1, out_features)
    itemsize = jnp.dtype(x2d.dtype).itemsize

    capacity = _vmem_capacity_bytes()
    budget = int(capacity * 0.65)            # tile footprint budget
    vmem_limit = int(capacity * 0.80)        # scoped VMEM limit handed to Mosaic

    if schedule_override is not None:
        tm, tn, tk = schedule_override
    else:
        tm, tn, tk = _choose_schedule(m, d_model, out_features, itemsize, budget)

    grid_m = pl.cdiv(m, tm)
    grid_n = pl.cdiv(out_features, tn)
    grid_k = pl.cdiv(d_model, tk)

    # Modeled HBM traffic of the actual schedule (keeps XLA's scheduling honest).
    x_reads = grid_n if grid_k > 1 else 1
    w_reads = 1 if (grid_n == 1 and grid_k == 1) else grid_m
    cost = pl.CostEstimate(
        flops=2 * m * d_model * out_features,
        transcendentals=0,
        bytes_accessed=itemsize * (m * d_model * x_reads
                                   + d_model * out_features * w_reads
                                   + out_features + m * out_features),
    )

    if grid_k == 1:
        # Weight fully K-resident: one MXU pass per (M, N) tile, no accumulator.
        # M outermost -> X streamed once from HBM; M is the megacore-sharded axis.
        grid_spec = pltpu.PrefetchScalarGridSpec(
            num_scalar_prefetch=0,
            grid=(grid_m, grid_n),
            in_specs=[
                pl.BlockSpec((tm, d_model), lambda i, j: (i, 0)),   # x tile
                pl.BlockSpec((d_model, tn), lambda i, j: (0, j)),   # W^T panel
                pl.BlockSpec((1, tn), lambda i, j: (0, j)),         # bias tile
            ],
            out_specs=pl.BlockSpec((tm, tn), lambda i, j: (i, j)),
        )
        kernel = _proj_kernel
        dim_sem = ("parallel", "parallel")
    else:
        # K-tiled path (large d_model / small VMEM, e.g. v7x): f32 accumulator,
        # K innermost and "arbitrary"; init on k==0, bias add + cast on k==last.
        grid_spec = pltpu.PrefetchScalarGridSpec(
            num_scalar_prefetch=0,
            grid=(grid_m, grid_n, grid_k),
            in_specs=[
                pl.BlockSpec((tm, tk), lambda i, j, k: (i, k)),     # x tile
                pl.BlockSpec((tk, tn), lambda i, j, k: (k, j)),     # W^T tile
                pl.BlockSpec((1, tn), lambda i, j, k: (0, j)),      # bias tile
            ],
            out_specs=pl.BlockSpec((tm, tn), lambda i, j, k: (i, j)),
            scratch_shapes=[pltpu.VMEM((tm, tn), jnp.float32)],
        )
        kernel = _proj_kernel_ktiled
        dim_sem = ("parallel", "parallel", "arbitrary")

    y2d = pl.pallas_call(
        kernel,
        out_shape=jax.ShapeDtypeStruct((m, out_features), x2d.dtype),
        grid_spec=grid_spec,
        compiler_params=pltpu.CompilerParams(
            dimension_semantics=dim_sem,
            vmem_limit_bytes=vmem_limit,
        ),
        cost_estimate=cost,
    )(x2d, weight_t, b2d)

    # view(*head_shape, heads, d_k) — head split is a layout-free wrapper reshape.
    return y2d.reshape(*head_shape, heads, d_k)


def init_prepare_mha_params(key, d_model, heads, d_k, dtype=jnp.float32):
    """PyTorch nn.Linear default init: U(-1/sqrt(fan_in), 1/sqrt(fan_in)).

    Returns the weight both in PyTorch layout (for the reference check) and in the
    pre-transposed (d_model, out_features) layout consumed by the kernel — the
    transpose is done exactly once here, never per forward call.
    """
    out_features = heads * d_k
    kw, kb = jax.random.split(key)
    bound = 1.0 / math.sqrt(d_model)
    weight = jax.random.uniform(kw, (out_features, d_model), dtype,
                                minval=-bound, maxval=bound)
    bias = jax.random.uniform(kb, (out_features,), dtype,
                              minval=-bound, maxval=bound)
    weight_t = jnp.asarray(weight.T)   # one-time layout conversion at init
    return weight, weight_t, bias


if __name__ == "__main__":
    key = jax.random.PRNGKey(0)
    kx, kp, kx2, kp2 = jax.random.split(key, 4)

    # --- Main check: MHA-like small shapes, weight-resident single-pass schedule ---
    seq, batch, d_model = 8, 2, 32
    heads, d_k = 4, 16                          # out_features = 64
    x = jax.random.normal(kx, (seq, batch, d_model), dtype=jnp.float32)
    weight, weight_t, bias = init_prepare_mha_params(kp, d_model, heads, d_k)

    out = prepare_for_mha(x, weight_t, bias, heads, d_k)
    out = jax.block_until_ready(out)
    ref = (x.reshape(-1, d_model) @ weight.T + bias).reshape(seq, batch, heads, d_k)
    assert out.shape == (seq, batch, heads, d_k)
    assert jnp.allclose(out, ref, atol=1e-4, rtol=1e-4)

    # --- Also exercise the K-tiled accumulator path (forced small schedule) ---
    d_model2 = 256
    x2 = jax.random.normal(kx2, (seq, batch, d_model2), dtype=jnp.float32)
    weight2, weight2_t, bias2 = init_prepare_mha_params(kp2, d_model2, heads, d_k)
    out2 = prepare_for_mha(x2, weight2_t, bias2, heads, d_k,
                           schedule_override=(16, 64, 128))    # grid_k = 2
    out2 = jax.block_until_ready(out2)
    ref2 = (x2.reshape(-1, d_model2) @ weight2.T + bias2).reshape(seq, batch, heads, d_k)
    assert out2.shape == (seq, batch, heads, d_k)
    assert jnp.allclose(out2, ref2, atol=1e-4, rtol=1e-4)

    print("KERNEL_OK")
</pallas_src>

<mosaic_0001>
module attributes {stable_mosaic.version = 11 : i64} {
  func.func @_proj_kernel(%arg0: i32, %arg1: i32, %arg2: memref<16x32xf32, #tpu.memory_space<vmem>>, %arg3: memref<32x64xf32, #tpu.memory_space<vmem>>, %arg4: memref<1x64xf32, #tpu.memory_space<vmem>>, %arg5: memref<16x64xf32, #tpu.memory_space<vmem>>) attributes {dimension_semantics = [#tpu.dimension_semantics<parallel>, #tpu.dimension_semantics<parallel>], iteration_bounds = array<i64: 1, 1>, scalar_prefetch = 0 : i64, scratch_operands = 0 : i64, tpu.core_type = #tpu.core_type<tc>, window_params = [{transform_indices = @transform_0, window_bounds = array<i64: 16, 32>}, {transform_indices = @transform_1, window_bounds = array<i64: 32, 64>}, {transform_indices = @transform_2, window_bounds = array<i64: 1, 64>}, {transform_indices = @transform_3, window_bounds = array<i64: 16, 64>}]} {
    %c0 = arith.constant 0 : index
    %c0_0 = arith.constant 0 : index
    %0 = vector.load %arg2[%c0, %c0_0] : memref<16x32xf32, #tpu.memory_space<vmem>>, vector<16x32xf32>
    %c0_1 = arith.constant 0 : index
    %c0_2 = arith.constant 0 : index
    %1 = vector.load %arg3[%c0_1, %c0_2] : memref<32x64xf32, #tpu.memory_space<vmem>>, vector<32x64xf32>
    %cst = arith.constant dense<0.000000e+00> : vector<16x64xf32>
    %2 = tpu.matmul %0, %1, %cst {dimension_numbers = #tpu.dot_dimension_numbers<[1], [0], [0], [1], [0, 0, 1, 1], [], []>} : vector<16x32xf32>, vector<32x64xf32>, vector<16x64xf32> -> vector<16x64xf32>
    %c0_3 = arith.constant 0 : index
    %c0_4 = arith.constant 0 : index
    %3 = vector.load %arg4[%c0_3, %c0_4] : memref<1x64xf32, #tpu.memory_space<vmem>>, vector<1x64xf32>
    %4 = vector.broadcast %3 : vector<1x64xf32> to vector<16x64xf32>
    %5 = arith.addf %2, %4 : vector<16x64xf32>
    %c0_5 = arith.constant 0 : index
    %c0_6 = arith.constant 0 : index
    %6 = vector.load %arg5[%c0_5, %c0_6] : memref<16x64xf32, #tpu.memory_space<vmem>>, vector<16x64xf32>
    tpu.vector_store %arg5[%c0_5, %c0_6], %5 {strides = array<i32>} : memref<16x64xf32, #tpu.memory_space<vmem>>, vector<16x64xf32>,
    return
  }
  func.func @transform_0(%arg0: i32, %arg1: i32) -> (i32, i32) {
    %c0_i32 = arith.constant 0 : i32
    %c0_i32_0 = arith.constant 0 : i32
    return %arg0, %c0_i32 : i32, i32
  }
  func.func @transform_1(%arg0: i32, %arg1: i32) -> (i32, i32) {
    %c0_i32 = arith.constant 0 : i32
    %c0_i32_0 = arith.constant 0 : i32
    return %c0_i32, %arg1 : i32, i32
  }
  func.func @transform_2(%arg0: i32, %arg1: i32) -> (i32, i32) {
    %c0_i32 = arith.constant 0 : i32
    %c0_i32_0 = arith.constant 0 : i32
    return %c0_i32, %arg1 : i32, i32
  }
  func.func @transform_3(%arg0: i32, %arg1: i32) -> (i32, i32) {
    %c0_i32 = arith.constant 0 : i32
    return %arg0, %arg1 : i32, i32
  }
}

</mosaic_0001>

<llo_original>
// kernel: tpu_custom_call.1
$region0: #{tpu_custom_call.1}
  #allocation0 [shape = 'u32[]', space=smem, size = 0x4, offset = 0x4, fixed_abs, tag = 'smem constant byte address 0x4 - core index']
  #allocation1 [shape = 'u32[144,128]{1,0:T(1,128)}', space=vmem, size = 0x12000, scoped, tag = 'internal scratch']
  %s0 = inlined_call_operand.hbm [shape: f32[16,32], index: 0, kind: input, shape index: {}]
  %s1 = inlined_call_operand.hbm [shape: f32[32,64], index: 1, kind: input, shape index: {}]
  %s2 = inlined_call_operand.vmem [shape: f32[1,64], index: 2, kind: input, shape index: {}]
  %s3 = inlined_call_operand.hbm [shape: f32[16,64], index: 3, kind: output, shape index: {}]
  %s4 = sld [smem:[#allocation0]]
  $region30: #{tpu_custom_call.1} parent=0
    _
  %s6 = ssub.s32 1, %s4
  %s7 = scalar_select 0, %s6, %s4
  $region1: #{tpu_custom_call.1} parent=0
    #allocation2 [shape = 'u8[8192]{0}', space=vmem, size = 0x2000, scoped, tag = 'input window, operand 0, single buffered']
    #allocation3 [shape = 's32[1]{0}', space=sflag, size = 0x4, scoped, tag = 'scoped memory for tpu_custom_call.1']
    #allocation4 [shape = 's32[1]{0}', space=sflag, size = 0x4, scoped, tag = 'scoped memory for tpu_custom_call.1']
    #allocation5 [shape = 'u8[16384]{0}', space=vmem, size = 0x4000, scoped, tag = 'input window, operand 1, single buffered']
    #allocation6 [shape = 's32[1]{0}', space=sflag, size = 0x4, scoped, tag = 'scoped memory for tpu_custom_call.1']
    #allocation7 [shape = 'u8[8192]{0}', space=vmem, size = 0x2000, scoped, tag = 'output window, operand 0, single buffered']
    %8 = vsyncpa [#allocation3], 0
    %9 = vsyncpa [#allocation6], 0
    %10 = vsyncpa [#allocation4], 0
    // Predicated region
    $region2: #{tpu_custom_call.1} parent=1 // pred_check
      _
    $region3: #{tpu_custom_call.1} parent=1 // pred_check_branch
      %12 = sbr.rel (0) target = $region5
    $region4: #{tpu_custom_call.1} parent=1 // pred_region
      %s14 = ssub.s32 256, 256
      %15 = vsyncadd [#allocation3], %s14
      %s16 = sshll.u32 [#allocation2], 4
      %s17 = int_to_ptr.vmem [resolvable:$true] %s16
      %22 = dma.hbm_to_vmem [thread:$0]  %s0, 256, %s17, [#allocation3], 128, 128, 8
    $region5: #{tpu_custom_call.1} parent=1 // pred_fallthru
      _
    // Predicated region
    $region6: #{tpu_custom_call.1} parent=1 // pred_check
      _
    $region7: #{tpu_custom_call.1} parent=1 // pred_check_branch
      %24 = sbr.rel (0) target = $region9
    $region8: #{tpu_custom_call.1} parent=1 // pred_region
      %s26 = ssub.s32 512, 512
      %27 = vsyncadd [#allocation6], %s26
      %s28 = sshll.u32 [#allocation5], 4
      %s29 = int_to_ptr.vmem [resolvable:$true] %s28
      %34 = dma.hbm_to_vmem [thread:$0]  %s1, 512, %s29, [#allocation6], 128, 128, 8
    $region9: #{tpu_custom_call.1} parent=1 // pred_fallthru
      _
    // Predicated region
    $region10: #{tpu_custom_call.1} parent=1 // pred_check
      _
    $region11: #{tpu_custom_call.1} parent=1 // pred_check_branch
      %36 = sbr.rel (0) target = $region13
    $region12: #{tpu_custom_call.1} parent=1 // pred_region
      _
    $region13: #{tpu_custom_call.1} parent=1 // pred_fallthru
      _
    // Predicated region
    $region14: #{tpu_custom_call.1} parent=1 // pred_check
      _
    $region15: #{tpu_custom_call.1} parent=1 // pred_check_branch
      %38 = sbr.rel (0) target = $region17
    $region16: #{tpu_custom_call.1} parent=1 // pred_region
      %39 = dma.done [#allocation3], 256
    $region17: #{tpu_custom_call.1} parent=1 // pred_fallthru
      _
    // Predicated region
    $region18: #{tpu_custom_call.1} parent=1 // pred_check
      _
    $region19: #{tpu_custom_call.1} parent=1 // pred_check_branch
      %41 = sbr.rel (0) target = $region21
    $region20: #{tpu_custom_call.1} parent=1 // pred_region
      %42 = dma.done [#allocation6], 512
    $region21: #{tpu_custom_call.1} parent=1 // pred_fallthru
      _
    %v43 = vld [vmem:[#allocation2] sm:$0xff]
    %v44 = vld [vmem:[#allocation2 + $0x8] sm:$0xff]
    %v45 = vld [vmem:[#allocation5] sm:$0xff]
    %v46 = vld [vmem:[#allocation5 + $0x8] sm:$0xff]
    %v47 = vld [vmem:[#allocation5 + $0x10] sm:$0xff]
    %v48 = vld [vmem:[#allocation5 + $0x18] sm:$0xff]
    %v49 = vld [vmem:[%s2] sm:$0x1]
    %v51 = vlaneseq
    %v52 = vshrl.u32 %v51, 7
    %v53 = vsub.s32 0, %v52
    %v54 = vrot.slane %v49, %v53
    %vm56 = vcmask 261120
    %v58 = vsel %vm56, %v43, 0
    %v61 = vsel %vm56, %v44, 0
    %63 = vmatprep.subr.mxu0 0.0
    %64 = vmatpush1.msra.mxu0 %v45
    %65 = vmatprep.subr.mxu0 0.0
    %66 = vmatpush1.msra.mxu0 %v46
    %67 = vmatprep.subr.mxu0 0.0
    %68 = vmatpush1.msra.mxu0 %v47
    %69 = vmatprep.subr.mxu0 0.0
    %70 = vmatpush1.msra.mxu0 %v48
    %71 = vmatprep.subr.mxu0 0.0
    %72 = vmatpush1.msra.mxu0 0.0
    %73 = vmatprep.subr.mxu0 0.0
    %74 = vmatpush1.msra.mxu0 0.0
    %75 = vmatprep.subr.mxu0 0.0
    %76 = vmatpush1.msra.mxu0 0.0
    %77 = vmatprep.subr.mxu0 0.0
    %78 = vmatpush1.msra.mxu0 0.0
    %79 = vmatprep.subr.mxu0 0.0
    %80 = vmatpush1.msra.mxu0 0.0
    %81 = vmatprep.subr.mxu0 0.0
    %82 = vmatpush1.msra.mxu0 0.0
    %83 = vmatprep.subr.mxu0 0.0
    %84 = vmatpush1.msra.mxu0 0.0
    %85 = vmatprep.subr.mxu0 0.0
    %86 = vmatpush1.msra.mxu0 0.0
    %87 = vmatprep.subr.mxu0 0.0
    %88 = vmatpush1.msra.mxu0 0.0
    %89 = vmatprep.subr.mxu0 0.0
    %90 = vmatpush1.msra.mxu0 0.0
    %91 = vmatprep.subr.mxu0 0.0
    %92 = vmatpush1.msra.mxu0 0.0
    %93 = vmatprep.subr.mxu0 0.0
    %94 = vmatpush1.msra.mxu0 0.0
    %95 = vmatprep.subr.mxu0 0.0
    %96 = vmatpush1.msra.mxu0 0.0
    %97 = vmatprep.subr.mxu0 0.0
    %98 = vmatpush1.msra.mxu0 0.0
    %99 = vmatprep.subr.mxu0 0.0
    %100 = vmatpush1.msra.mxu0 0.0
    %101 = vmatprep.subr.mxu0 0.0
    %102 = vmatpush1.msra.mxu0 0.0
    %103 = vmatprep.subr.mxu0 0.0
    %104 = vmatpush1.msra.mxu0 0.0
    %105 = vmatprep.subr.mxu0 0.0
    %106 = vmatpush1.msra.mxu0 0.0
    %107 = vmatprep.subr.mxu0 0.0
    %108 = vmatpush1.msra.mxu0 0.0
    %109 = vmatprep.subr.mxu0 0.0
    %110 = vmatpush1.msra.mxu0 0.0
    %111 = vmatprep.subr.mxu0 0.0
    %112 = vmatpush1.msra.mxu0 0.0
    %113 = vmatprep.subr.mxu0 0.0
    %114 = vmatpush1.msra.mxu0 0.0
    %115 = vmatprep.subr.mxu0 0.0
    %116 = vmatpush1.msra.mxu0 0.0
    %117 = vmatprep.subr.mxu0 0.0
    %118 = vmatpush1.msra.mxu0 0.0
    %119 = vmatprep.subr.mxu0 0.0
    %120 = vmatpush1.msra.mxu0 0.0
    %121 = vmatprep.subr.mxu0 0.0
    %122 = vmatpush1.msra.mxu0 0.0
    %123 = vmatprep.subr.mxu0 0.0
    %124 = vmatpush1.msra.mxu0 0.0
    %125 = vmatprep.subr.mxu0 0.0
    %126 = vmatpush1.msra.mxu0 0.0
    %127 = vmatprep.mubr.f32.mxu0 0.0
    %128 = vmatmul.mubr.f32.gmra.mrb[0].mxu0 %v58
    %v129 = vpop.f32.mrb[0].mxu0
    %v130 = vadd.f32 %v54, %v129
    %v131 = vpop.f32.mrb[0].mxu0
    %132 = vmatprep.mubr.f32.mxu0 0.0
    %133 = vmatmul.mubr.f32.gmra.mrb[0].mxu0 %v61
    %v134 = vpop.f32.mrb[0].mxu0
    %v135 = vadd.f32 %v54, %v134
    %v136 = vpop.f32.mrb[0].mxu0
    %137 = vdwg.mxu0
    %vm138 = vcmask 523264
    %139 = vst.msk [vmem:[#allocation7] sm:$0xff] %vm138, %v130
    %140 = vst.msk [vmem:[#allocation7 + $0x8] sm:$0xff] %vm138, %v135
    // Predicated region
    $region22: #{tpu_custom_call.1} parent=1 // pred_check
      _
    $region23: #{tpu_custom_call.1} parent=1 // pred_check_branch
      %142 = sbr.rel (0) target = $region25
    $region24: #{tpu_custom_call.1} parent=1 // pred_region
      %s144 = ssub.s32 256, 256
      %145 = vsyncadd [#allocation4], %s144
      %s146 = sshll.u32 [#allocation7], 4
      %s147 = int_to_ptr.vmem [resolvable:$true] %s146
      %152 = dma.vmem_to_hbm [thread:$0]  %s147, 256, %s3, [#allocation4], 128, 128, 8
    $region25: #{tpu_custom_call.1} parent=1 // pred_fallthru
      _
    // Predicated region
    $region26: #{tpu_custom_call.1} parent=1 // pred_check
      _
    $region27: #{tpu_custom_call.1} parent=1 // pred_check_branch
      %154 = sbr.rel (0) target = $region29
    $region28: #{tpu_custom_call.1} parent=1 // pred_region
      %155 = dma.done [#allocation4], 256
    $region29: #{tpu_custom_call.1} parent=1 // pred_fallthru
      _
    %156 = vsyncpa [#allocation3], 1
    %157 = vsyncpa [#allocation6], 1
    %158 = vsyncpa [#allocation4], 1

</llo_original>
